<compile_context>
chip_gen: v7x
topology: tpu7x:2x2x1
jax: 0.10.0
libtpu: 0.0.40
codegen_flags: <defaults>
</compile_context>

<pallas_src>
import jax
import jax.numpy as jnp
from jax.experimental import pallas as pl
from jax.experimental.pallas import tpu as pltpu


# ---------------- Pallas kernel ----------------

def _h_sigmoid_kernel(x_ref, o_ref):
    """Fused elementwise h_sigmoid: relu6(x + 3) * (1/6)."""
    x = x_ref[...]
    y = jnp.minimum(jnp.maximum(x + 3.0, 0.0), 6.0) * (1.0 / 6.0)
    o_ref[...] = y.astype(o_ref.dtype)


# ---------------- Wrapper (layout plumbing only) ----------------

def _round_up(a, b):
    return ((a + b - 1) // b) * b


def _sublane_multiple(dtype):
    itemsize = jnp.dtype(dtype).itemsize
    return {4: 8, 2: 16, 1: 32}.get(itemsize, 8)


_TARGET_BLOCK_BYTES = 3 << 20  # ~3 MiB/block: 2 bufs x (in + out) = 12 MiB < v5e's 16 MiB


@jax.jit
def h_sigmoid(x):
    """h_sigmoid forward matching the PyTorch module: relu6(x + 3) / 6."""
    orig_shape = x.shape
    dtype = x.dtype
    total = int(x.size)
    itemsize = jnp.dtype(dtype).itemsize
    sub = _sublane_multiple(dtype)

    # ---- lane-dense flat view: pick LANE that divides total -> no pad, no slice ----
    if total % 512 == 0:
        lane = 512
    elif total % 256 == 0:
        lane = 256
    elif total % 128 == 0:
        lane = 128
    else:
        lane = 512 if total >= 512 else 128  # rare fallback: pad (one extra HBM pass)

    flat = x.reshape(-1)
    padded_total = _round_up(max(total, 1), lane)
    needs_pad = padded_total != total
    if needs_pad:
        flat = jnp.pad(flat, (0, padded_total - total))
    rows = padded_total // lane
    x2d = flat.reshape(rows, lane)

    # ---- row tile: ~3 MiB blocks, dtype-aware sublane multiple, >=2 grid steps ----
    if rows <= sub:
        tm = rows  # single full-extent block (block dims == array dims is always legal)
    else:
        target = max(sub, (_TARGET_BLOCK_BYTES // (lane * itemsize)) // sub * sub)
        half = _round_up(pl.cdiv(rows, 2), sub)  # keep >= 2 steps for v7x megacore
        tm = max(min(target, half), sub)
    grid_m = pl.cdiv(rows, tm)  # Pallas masks the overhanging final block

    out2d = pl.pallas_call(
        _h_sigmoid_kernel,
        out_shape=jax.ShapeDtypeStruct((rows, lane), dtype),
        grid_spec=pltpu.PrefetchScalarGridSpec(
            num_scalar_prefetch=0,
            grid=(grid_m,),
            in_specs=[pl.BlockSpec((tm, lane), lambda i: (i, 0))],
            out_specs=pl.BlockSpec((tm, lane), lambda i: (i, 0)),
        ),
        compiler_params=pltpu.CompilerParams(
            dimension_semantics=("parallel",),  # independent tiles -> megacore on v7x
            vmem_limit_bytes=32 << 20,
        ),
    )(x2d)

    if needs_pad:
        return out2d.reshape(-1)[:total].reshape(orig_shape)
    return out2d.reshape(orig_shape)


if __name__ == "__main__":
    key = jax.random.PRNGKey(0)

    # Small NCHW activation consistent with module usage (pure elementwise op).
    N, C, H, W = 2, 4, 16, 16
    # Scale so both clamping branches of relu6(x + 3) are exercised.
    x = 4.0 * jax.random.normal(key, (N, C, H, W), dtype=jnp.float32)

    out = h_sigmoid(x)
    jax.block_until_ready(out)

    # Correctness check against a plain-JAX reference of the PyTorch module.
    ref = jnp.clip(x + 3.0, 0.0, 6.0) / 6.0
    assert out.shape == x.shape
    assert out.dtype == x.dtype
    assert jnp.allclose(out, ref, atol=1e-6, rtol=1e-6)

    print("KERNEL_OK")
</pallas_src>

<mosaic_0001>
module attributes {stable_mosaic.version = 11 : i64} {
  func.func @_h_sigmoid_kernel(%arg0: i32, %arg1: memref<4x512xf32, #tpu.memory_space<vmem>>, %arg2: memref<4x512xf32, #tpu.memory_space<vmem>>) attributes {dimension_semantics = [#tpu.dimension_semantics<parallel>], iteration_bounds = array<i64: 1>, scalar_prefetch = 0 : i64, scratch_operands = 0 : i64, tpu.core_type = #tpu.core_type<tc>, window_params = [{transform_indices = @transform_0, window_bounds = array<i64: 4, 512>}, {transform_indices = @transform_1, window_bounds = array<i64: 4, 512>}]} {
    %c0 = arith.constant 0 : index
    %c0_0 = arith.constant 0 : index
    %0 = vector.load %arg1[%c0, %c0_0] : memref<4x512xf32, #tpu.memory_space<vmem>>, vector<4x512xf32>
    %cst = arith.constant 3.000000e+00 : f32
    %1 = vector.broadcast %cst : f32 to vector<4x512xf32>
    %2 = arith.addf %0, %1 : vector<4x512xf32>
    %cst_1 = arith.constant 0.000000e+00 : f32
    %3 = vector.broadcast %cst_1 : f32 to vector<4x512xf32>
    %4 = arith.maximumf %2, %3 : vector<4x512xf32>
    %cst_2 = arith.constant 6.000000e+00 : f32
    %5 = vector.broadcast %cst_2 : f32 to vector<4x512xf32>
    %6 = arith.minimumf %4, %5 : vector<4x512xf32>
    %cst_3 = arith.constant 0.166666672 : f32
    %7 = vector.broadcast %cst_3 : f32 to vector<4x512xf32>
    %8 = arith.mulf %6, %7 : vector<4x512xf32>
    %c0_4 = arith.constant 0 : index
    %c0_5 = arith.constant 0 : index
    %9 = vector.load %arg2[%c0_4, %c0_5] : memref<4x512xf32, #tpu.memory_space<vmem>>, vector<4x512xf32>
    tpu.vector_store %arg2[%c0_4, %c0_5], %8 {strides = array<i32>} : memref<4x512xf32, #tpu.memory_space<vmem>>, vector<4x512xf32>,
    return
  }
  func.func @transform_0(%arg0: i32) -> (i32, i32) {
    %c0_i32 = arith.constant 0 : i32
    %c0_i32_0 = arith.constant 0 : i32
    return %arg0, %c0_i32 : i32, i32
  }
  func.func @transform_1(%arg0: i32) -> (i32, i32) {
    %c0_i32 = arith.constant 0 : i32
    %c0_i32_0 = arith.constant 0 : i32
    return %arg0, %c0_i32 : i32, i32
  }
}

</mosaic_0001>

<llo_original>
// kernel: h_sigmoid.1
$region0: #{h_sigmoid.1}
  #allocation0 [shape = 'u32[]', space=smem, size = 0x4, offset = 0x4, fixed_abs, tag = 'smem constant byte address 0x4 - core index']
  #allocation1 [shape = 'u32[144,128]{1,0:T(1,128)}', space=vmem, size = 0x12000, scoped, tag = 'internal scratch']
  %s0 = inlined_call_operand.vmem [shape: f32[4,512], index: 0, kind: input, shape index: {}]
  %s1 = inlined_call_operand.vmem [shape: f32[4,512], index: 1, kind: output, shape index: {}]
  %s2 = sld [smem:[#allocation0]]
  $region14: #{h_sigmoid.1} parent=0
    _
  %s4 = ssub.s32 1, %s2
  %s5 = scalar_select 0, %s4, %s2
  // Predicated region
  $region2: #{h_sigmoid.1} parent=0 // pred_check
    _
  $region3: #{h_sigmoid.1} parent=0 // pred_check_branch
    %7 = sbr.rel (0) target = $region5
  $region4: #{h_sigmoid.1} parent=0 // pred_region
    _
  $region5: #{h_sigmoid.1} parent=0 // pred_fallthru
    _
  %v8 = vld [vmem:[%s0] sm:$0xff]
  %v9 = vld [vmem:[%s0 + $0x8] sm:$0xff]
  %v10 = vadd.f32 %v8, 3.0
  %v11 = vadd.f32 %v9, 3.0
  %v12 = vmax.f32 %v10, 0.0
  %v13 = vmax.f32 %v11, 0.0
  %v14 = vmin.f32 %v12, 6.0
  %v15 = vmin.f32 %v13, 6.0
  %v16 = vmul.f32 %v14, 0.16666667
  %v17 = vmul.f32 %v15, 0.16666667
  %18 = vst [vmem:[%s1] sm:$0xff] %v16
  %19 = vst [vmem:[%s1 + $0x8] sm:$0xff] %v17
  // Predicated region
  $region6: #{h_sigmoid.1} parent=0 // pred_check
    _
  $region7: #{h_sigmoid.1} parent=0 // pred_check_branch
    %21 = sbr.rel (0) target = $region9
  $region8: #{h_sigmoid.1} parent=0 // pred_region
    _
  $region9: #{h_sigmoid.1} parent=0 // pred_fallthru
    _
  // Predicated region
  $region10: #{h_sigmoid.1} parent=0 // pred_check
    _
  $region11: #{h_sigmoid.1} parent=0 // pred_check_branch
    %23 = sbr.rel (0) target = $region13
  $region12: #{h_sigmoid.1} parent=0 // pred_region
    _
  $region13: #{h_sigmoid.1} parent=0 // pred_fallthru
    _

</llo_original>
